<compile_context>
chip_gen: v6e
topology: v6e:2x2x1
jax: 0.10.0
libtpu: 0.0.40
codegen_flags: <defaults>
</compile_context>

<pallas_src>
import numpy as np
import jax
import jax.numpy as jnp
from jax import lax
from jax.experimental import pallas as pl
from jax.experimental.pallas import tpu as pltpu


def _mlp_attn_kernel(
    x_ref,
    w1_ref, b1_ref,          # fc1 with bn1 folded in
    w2_ref, b2_ref,          # fc2 with bn2 folded in
    wqkv_ref, bqkv_ref,      # fused Q/K/V projection (64, 192)
    w3_ref, b3_ref,          # fc3 with bn3 folded in
    w4_ref, b4_ref,          # fc4
    out_ref,
):
    x = x_ref[...]                                                    # (B, D_in)

    # fc1 (+ folded bn1) -> relu
    h = jnp.dot(x, w1_ref[...], preferred_element_type=jnp.float32) + b1_ref[...]
    h = jnp.maximum(h, 0.0)                                           # (B, 128)

    # dropout(p=0.21) is identity in eval mode.

    # fc2 (+ folded bn2) -> relu
    h = jnp.dot(h, w2_ref[...], preferred_element_type=jnp.float32) + b2_ref[...]
    h = jnp.maximum(h, 0.0)                                           # (B, 64)

    # SelfAttention(64): fused QKV projection, scores over the batch axis
    # (the PyTorch module gets a 2-D activation, so attention mixes rows of B).
    qkv = jnp.dot(h, wqkv_ref[...], preferred_element_type=jnp.float32) + bqkv_ref[...]
    d = h.shape[-1]                                                   # 64
    q = qkv[:, 0 * d:1 * d]
    k = qkv[:, 1 * d:2 * d]
    v = qkv[:, 2 * d:3 * d]

    scores = lax.dot_general(
        q, k, (((1,), (1,)), ((), ())),
        preferred_element_type=jnp.float32,
    ) * (1.0 / jnp.sqrt(jnp.float32(d)))                              # (B, B)

    m = jnp.max(scores, axis=-1, keepdims=True)
    e = jnp.exp(scores - m)
    denom = jnp.sum(e, axis=-1, keepdims=True)
    r = pl.reciprocal(denom, approx=True)                             # EUP vrcp
    r = r * (2.0 - denom * r)                                         # one Newton step -> ~f32 accuracy
    attn = e * r
    h = jnp.dot(attn, v, preferred_element_type=jnp.float32) + h      # residual

    # dropout(p=0.31) identity in eval mode.

    # fc3 (+ folded bn3) -> relu
    h = jnp.dot(h, w3_ref[...], preferred_element_type=jnp.float32) + b3_ref[...]
    h = jnp.maximum(h, 0.0)                                           # (B, 32)

    # dropout(p=0.11) identity in eval mode.

    # fc4
    out_ref[...] = (
        jnp.dot(h, w4_ref[...], preferred_element_type=jnp.float32) + b4_ref[...]
    )                                                                 # (B, 2)


def neural_network_forward(x, params):
    """x: (B, input_size) float32; params: dict of folded, pre-transposed weights."""
    B, d_in = x.shape
    operands = (
        x,
        params["w1"], params["b1"],
        params["w2"], params["b2"],
        params["wqkv"], params["bqkv"],
        params["w3"], params["b3"],
        params["w4"], params["b4"],
    )

    # Whole-array VMEM residency, no grid: every operand is tiny.
    vmem_spec = pl.BlockSpec(memory_space=pltpu.MemorySpace.VMEM)
    in_specs = [vmem_spec] * len(operands)
    out_spec = pl.BlockSpec(memory_space=pltpu.MemorySpace.VMEM)

    flops = 2 * B * (
        d_in * 128 + 128 * 64 + 64 * 192 + B * 64 + B * 64 + 64 * 32 + 32 * 2
    )
    bytes_accessed = sum(int(np.prod(op.shape)) * 4 for op in operands) + B * 2 * 4
    cost = pl.CostEstimate(
        flops=flops, transcendentals=B * B, bytes_accessed=bytes_accessed
    )

    return pl.pallas_call(
        _mlp_attn_kernel,
        out_shape=jax.ShapeDtypeStruct((B, 2), jnp.float32),
        in_specs=in_specs,
        out_specs=out_spec,
        cost_estimate=cost,
    )(*operands)


def _init_raw_params(key, input_size):
    """Deterministic synthetic parameters (weights pre-transposed to (in, out)),
    with BatchNorm kept separate so the reference can validate the fold."""
    ks = jax.random.split(key, 32)
    it = iter(range(32))

    def linear(d_in, d_out):
        kw, kb = ks[next(it)], ks[next(it)]
        lim = 1.0 / np.sqrt(d_in)
        w = jax.random.uniform(kw, (d_in, d_out), jnp.float32, -lim, lim)
        b = jax.random.uniform(kb, (1, d_out), jnp.float32, -lim, lim)
        return w, b

    def bn(d):
        kg, kb, km, kv = ks[next(it)], ks[next(it)], ks[next(it)], ks[next(it)]
        gamma = 1.0 + 0.1 * jax.random.normal(kg, (1, d), jnp.float32)
        beta = 0.1 * jax.random.normal(kb, (1, d), jnp.float32)
        rmean = 0.1 * jax.random.normal(km, (1, d), jnp.float32)
        rvar = 1.0 + 0.1 * jax.random.uniform(kv, (1, d), jnp.float32)
        eps = 1e-5
        scale = gamma / jnp.sqrt(rvar + eps)
        shift = beta - rmean * scale
        return scale, shift

    p = {}
    p["w1"], p["b1"] = linear(input_size, 128)
    p["s1"], p["t1"] = bn(128)
    p["w2"], p["b2"] = linear(128, 64)
    p["s2"], p["t2"] = bn(64)
    p["wq"], p["bq"] = linear(64, 64)
    p["wk"], p["bk"] = linear(64, 64)
    p["wv"], p["bv"] = linear(64, 64)
    p["w3"], p["b3"] = linear(64, 32)
    p["s3"], p["t3"] = bn(32)
    p["w4"], p["b4"] = linear(32, 2)
    return p


def _fold_params(p):
    """Fold eval-mode BN into the adjacent Linear; fuse Q/K/V into one matmul."""
    f = {}
    f["w1"] = p["w1"] * p["s1"]
    f["b1"] = p["b1"] * p["s1"] + p["t1"]
    f["w2"] = p["w2"] * p["s2"]
    f["b2"] = p["b2"] * p["s2"] + p["t2"]
    f["wqkv"] = jnp.concatenate([p["wq"], p["wk"], p["wv"]], axis=1)   # (64, 192)
    f["bqkv"] = jnp.concatenate([p["bq"], p["bk"], p["bv"]], axis=1)   # (1, 192)
    f["w3"] = p["w3"] * p["s3"]
    f["b3"] = p["b3"] * p["s3"] + p["t3"]
    f["w4"] = p["w4"]
    f["b4"] = p["b4"]
    return f


def _reference_forward(x, p):
    """Pure-JAX reference mirroring the PyTorch eval-mode forward (BN unfolded)."""
    h = jnp.maximum((x @ p["w1"] + p["b1"]) * p["s1"] + p["t1"], 0.0)
    h = jnp.maximum((h @ p["w2"] + p["b2"]) * p["s2"] + p["t2"], 0.0)
    q = h @ p["wq"] + p["bq"]
    k = h @ p["wk"] + p["bk"]
    v = h @ p["wv"] + p["bv"]
    scores = (q @ k.T) / np.sqrt(q.shape[-1])
    attn = jax.nn.softmax(scores, axis=-1)
    h = attn @ v + h
    h = jnp.maximum((h @ p["w3"] + p["b3"]) * p["s3"] + p["t3"], 0.0)
    return h @ p["w4"] + p["b4"]


if __name__ == "__main__":
    key = jax.random.PRNGKey(0)
    k_x, k_p = jax.random.split(key)

    batch = 8          # multiple of 8 (f32 sublane tile)
    input_size = 32
    x = jax.random.normal(k_x, (batch, input_size), jnp.float32)

    raw_params = _init_raw_params(k_p, input_size)
    params = _fold_params(raw_params)

    out = neural_network_forward(x, params)
    out = jax.block_until_ready(out)

    ref = _reference_forward(x, raw_params)
    assert out.shape == (batch, 2)
    np.testing.assert_allclose(np.asarray(out), np.asarray(ref), rtol=1e-5, atol=1e-5)

    print("KERNEL_OK")
</pallas_src>

<mosaic_0001>
module attributes {stable_mosaic.version = 11 : i64} {
  func.func @_mlp_attn_kernel(%arg0: memref<8x32xf32, #tpu.memory_space<vmem>>, %arg1: memref<32x128xf32, #tpu.memory_space<vmem>>, %arg2: memref<1x128xf32, #tpu.memory_space<vmem>>, %arg3: memref<128x64xf32, #tpu.memory_space<vmem>>, %arg4: memref<1x64xf32, #tpu.memory_space<vmem>>, %arg5: memref<64x192xf32, #tpu.memory_space<vmem>>, %arg6: memref<1x192xf32, #tpu.memory_space<vmem>>, %arg7: memref<64x32xf32, #tpu.memory_space<vmem>>, %arg8: memref<1x32xf32, #tpu.memory_space<vmem>>, %arg9: memref<32x2xf32, #tpu.memory_space<vmem>>, %arg10: memref<1x2xf32, #tpu.memory_space<vmem>>, %arg11: memref<8x2xf32, #tpu.memory_space<vmem>>) attributes {dimension_semantics = [], scalar_prefetch = 0 : i64, scratch_operands = 0 : i64, tpu.core_type = #tpu.core_type<tc>} {
    %c0 = arith.constant 0 : index
    %c0_0 = arith.constant 0 : index
    %0 = vector.load %arg0[%c0, %c0_0] : memref<8x32xf32, #tpu.memory_space<vmem>>, vector<8x32xf32>
    %c0_1 = arith.constant 0 : index
    %c0_2 = arith.constant 0 : index
    %1 = vector.load %arg1[%c0_1, %c0_2] : memref<32x128xf32, #tpu.memory_space<vmem>>, vector<32x128xf32>
    %cst = arith.constant dense<0.000000e+00> : vector<8x128xf32>
    %2 = tpu.matmul %0, %1, %cst {dimension_numbers = #tpu.dot_dimension_numbers<[1], [0], [0], [1], [0, 0, 1, 1], [], []>} : vector<8x32xf32>, vector<32x128xf32>, vector<8x128xf32> -> vector<8x128xf32>
    %c0_3 = arith.constant 0 : index
    %c0_4 = arith.constant 0 : index
    %3 = vector.load %arg2[%c0_3, %c0_4] : memref<1x128xf32, #tpu.memory_space<vmem>>, vector<1x128xf32>
    %4 = vector.broadcast %3 : vector<1x128xf32> to vector<8x128xf32>
    %5 = arith.addf %2, %4 : vector<8x128xf32>
    %cst_5 = arith.constant 0.000000e+00 : f32
    %6 = vector.broadcast %cst_5 : f32 to vector<8x128xf32>
    %7 = arith.maximumf %5, %6 : vector<8x128xf32>
    %c0_6 = arith.constant 0 : index
    %c0_7 = arith.constant 0 : index
    %8 = vector.load %arg3[%c0_6, %c0_7] : memref<128x64xf32, #tpu.memory_space<vmem>>, vector<128x64xf32>
    %cst_8 = arith.constant dense<0.000000e+00> : vector<8x64xf32>
    %9 = tpu.matmul %7, %8, %cst_8 {dimension_numbers = #tpu.dot_dimension_numbers<[1], [0], [0], [1], [0, 0, 1, 1], [], []>} : vector<8x128xf32>, vector<128x64xf32>, vector<8x64xf32> -> vector<8x64xf32>
    %c0_9 = arith.constant 0 : index
    %c0_10 = arith.constant 0 : index
    %10 = vector.load %arg4[%c0_9, %c0_10] : memref<1x64xf32, #tpu.memory_space<vmem>>, vector<1x64xf32>
    %11 = vector.broadcast %10 : vector<1x64xf32> to vector<8x64xf32>
    %12 = arith.addf %9, %11 : vector<8x64xf32>
    %cst_11 = arith.constant 0.000000e+00 : f32
    %13 = vector.broadcast %cst_11 : f32 to vector<8x64xf32>
    %14 = arith.maximumf %12, %13 : vector<8x64xf32>
    %c0_12 = arith.constant 0 : index
    %c0_13 = arith.constant 0 : index
    %15 = vector.load %arg5[%c0_12, %c0_13] : memref<64x192xf32, #tpu.memory_space<vmem>>, vector<64x192xf32>
    %cst_14 = arith.constant dense<0.000000e+00> : vector<8x192xf32>
    %16 = tpu.matmul %14, %15, %cst_14 {dimension_numbers = #tpu.dot_dimension_numbers<[1], [0], [0], [1], [0, 0, 1, 1], [], []>} : vector<8x64xf32>, vector<64x192xf32>, vector<8x192xf32> -> vector<8x192xf32>
    %c0_15 = arith.constant 0 : index
    %c0_16 = arith.constant 0 : index
    %17 = vector.load %arg6[%c0_15, %c0_16] : memref<1x192xf32, #tpu.memory_space<vmem>>, vector<1x192xf32>
    %18 = vector.broadcast %17 : vector<1x192xf32> to vector<8x192xf32>
    %19 = arith.addf %16, %18 : vector<8x192xf32>
    %20 = vector.extract_strided_slice %19 {offsets = [0, 0], sizes = [8, 64], strides = [1, 1]} : vector<8x192xf32> to vector<8x64xf32>
    %21 = vector.extract_strided_slice %19 {offsets = [0, 64], sizes = [8, 64], strides = [1, 1]} : vector<8x192xf32> to vector<8x64xf32>
    %22 = vector.extract_strided_slice %19 {offsets = [0, 128], sizes = [8, 64], strides = [1, 1]} : vector<8x192xf32> to vector<8x64xf32>
    %cst_17 = arith.constant dense<0.000000e+00> : vector<8x8xf32>
    %23 = tpu.matmul %20, %21, %cst_17 {dimension_numbers = #tpu.dot_dimension_numbers<[1], [1], [0], [0], [0, 0, 1, 0], [], []>} : vector<8x64xf32>, vector<8x64xf32>, vector<8x8xf32> -> vector<8x8xf32>
    %cst_18 = arith.constant 6.400000e+01 : f32
    %24 = math.sqrt %cst_18 : f32
    %cst_19 = arith.constant 1.000000e+00 : f32
    %25 = arith.divf %cst_19, %24 : f32
    %26 = vector.broadcast %25 : f32 to vector<8x8xf32>
    %27 = arith.mulf %23, %26 : vector<8x8xf32>
    %cst_20 = arith.constant dense<0xFF800000> : vector<8xf32>
    %28 = vector.multi_reduction <maximumf>, %27, %cst_20 [1] : vector<8x8xf32> to vector<8xf32>
    %29 = vector.shape_cast %28 : vector<8xf32> to vector<8x1xf32>
    %30 = vector.broadcast %29 : vector<8x1xf32> to vector<8x8xf32>
    %31 = arith.subf %27, %30 : vector<8x8xf32>
    %32 = math.exp %31 : vector<8x8xf32>
    %cst_21 = arith.constant dense<0.000000e+00> : vector<8xf32>
    %33 = vector.multi_reduction <add>, %32, %cst_21 [1] : vector<8x8xf32> to vector<8xf32>
    %34 = vector.shape_cast %33 : vector<8xf32> to vector<8x1xf32>
    %35 = tpu.reciprocal %34 {approx = true} : vector<8x1xf32> -> vector<8x1xf32>
    %36 = arith.mulf %34, %35 : vector<8x1xf32>
    %cst_22 = arith.constant 2.000000e+00 : f32
    %37 = vector.broadcast %cst_22 : f32 to vector<8x1xf32>
    %38 = arith.subf %37, %36 : vector<8x1xf32>
    %39 = arith.mulf %35, %38 : vector<8x1xf32>
    %40 = vector.broadcast %39 : vector<8x1xf32> to vector<8x8xf32>
    %41 = arith.mulf %32, %40 : vector<8x8xf32>
    %cst_23 = arith.constant dense<0.000000e+00> : vector<8x64xf32>
    %42 = tpu.matmul %41, %22, %cst_23 {dimension_numbers = #tpu.dot_dimension_numbers<[1], [0], [0], [1], [0, 0, 1, 1], [], []>} : vector<8x8xf32>, vector<8x64xf32>, vector<8x64xf32> -> vector<8x64xf32>
    %43 = arith.addf %42, %14 : vector<8x64xf32>
    %c0_24 = arith.constant 0 : index
    %c0_25 = arith.constant 0 : index
    %44 = vector.load %arg7[%c0_24, %c0_25] : memref<64x32xf32, #tpu.memory_space<vmem>>, vector<64x32xf32>
    %cst_26 = arith.constant dense<0.000000e+00> : vector<8x32xf32>
    %45 = tpu.matmul %43, %44, %cst_26 {dimension_numbers = #tpu.dot_dimension_numbers<[1], [0], [0], [1], [0, 0, 1, 1], [], []>} : vector<8x64xf32>, vector<64x32xf32>, vector<8x32xf32> -> vector<8x32xf32>
    %c0_27 = arith.constant 0 : index
    %c0_28 = arith.constant 0 : index
    %46 = vector.load %arg8[%c0_27, %c0_28] : memref<1x32xf32, #tpu.memory_space<vmem>>, vector<1x32xf32>
    %47 = vector.broadcast %46 : vector<1x32xf32> to vector<8x32xf32>
    %48 = arith.addf %45, %47 : vector<8x32xf32>
    %cst_29 = arith.constant 0.000000e+00 : f32
    %49 = vector.broadcast %cst_29 : f32 to vector<8x32xf32>
    %50 = arith.maximumf %48, %49 : vector<8x32xf32>
    %c0_30 = arith.constant 0 : index
    %c0_31 = arith.constant 0 : index
    %51 = vector.load %arg9[%c0_30, %c0_31] : memref<32x2xf32, #tpu.memory_space<vmem>>, vector<32x2xf32>
    %cst_32 = arith.constant dense<0.000000e+00> : vector<8x2xf32>
    %52 = tpu.matmul %50, %51, %cst_32 {dimension_numbers = #tpu.dot_dimension_numbers<[1], [0], [0], [1], [0, 0, 1, 1], [], []>} : vector<8x32xf32>, vector<32x2xf32>, vector<8x2xf32> -> vector<8x2xf32>
    %c0_33 = arith.constant 0 : index
    %c0_34 = arith.constant 0 : index
    %53 = vector.load %arg10[%c0_33, %c0_34] : memref<1x2xf32, #tpu.memory_space<vmem>>, vector<1x2xf32>
    %54 = vector.broadcast %53 : vector<1x2xf32> to vector<8x2xf32>
    %55 = arith.addf %52, %54 : vector<8x2xf32>
    %c0_35 = arith.constant 0 : index
    %c0_36 = arith.constant 0 : index
    %56 = vector.load %arg11[%c0_35, %c0_36] : memref<8x2xf32, #tpu.memory_space<vmem>>, vector<8x2xf32>
    tpu.vector_store %arg11[%c0_35, %c0_36], %55 {strides = array<i32>} : memref<8x2xf32, #tpu.memory_space<vmem>>, vector<8x2xf32>,
    return
  }
}

</mosaic_0001>

<llo_original>
// kernel: tpu_custom_call.1
$region0: #{tpu_custom_call.1}
  #allocation0 [shape = 'u32[]', space=smem, size = 0x4, offset = 0x4, fixed_abs, tag = 'smem constant byte address 0x4 - core index']
  #allocation1 [shape = 'u32[144,128]{1,0:T(1,128)}', space=vmem, size = 0x12000, scoped, tag = 'internal scratch']
  %s0 = inlined_call_operand.vmem [shape: f32[8,32], index: 0, kind: input, shape index: {}]
  %s1 = inlined_call_operand.vmem [shape: f32[32,128], index: 1, kind: input, shape index: {}]
  %s2 = inlined_call_operand.vmem [shape: f32[1,128], index: 2, kind: input, shape index: {}]
  %s3 = inlined_call_operand.vmem [shape: f32[128,64], index: 3, kind: input, shape index: {}]
  %s4 = inlined_call_operand.vmem [shape: f32[1,64], index: 4, kind: input, shape index: {}]
  %s5 = inlined_call_operand.vmem [shape: f32[64,192], index: 5, kind: input, shape index: {}]
  %s6 = inlined_call_operand.vmem [shape: f32[1,192], index: 6, kind: input, shape index: {}]
  %s7 = inlined_call_operand.vmem [shape: f32[64,32], index: 7, kind: input, shape index: {}]
  %s8 = inlined_call_operand.vmem [shape: f32[1,32], index: 8, kind: input, shape index: {}]
  %s9 = inlined_call_operand.vmem [shape: f32[32,2], index: 9, kind: input, shape index: {}]
  %s10 = inlined_call_operand.vmem [shape: f32[1,2], index: 10, kind: input, shape index: {}]
  %s11 = inlined_call_operand.vmem [shape: f32[8,2], index: 11, kind: output, shape index: {}]
  %s12 = sld [smem:[#allocation0]]
  $region54: #{tpu_custom_call.1} parent=0
    _
  %s14 = ssub.s32 1, %s12
  %s15 = scalar_select 0, %s14, %s12
  // Predicated region
  $region2: #{tpu_custom_call.1} parent=0 // pred_check
    _
  $region3: #{tpu_custom_call.1} parent=0 // pred_check_branch
    %17 = sbr.rel (0) target = $region5
  $region4: #{tpu_custom_call.1} parent=0 // pred_region
    _
  $region5: #{tpu_custom_call.1} parent=0 // pred_fallthru
    _
  // Predicated region
  $region6: #{tpu_custom_call.1} parent=0 // pred_check
    _
  $region7: #{tpu_custom_call.1} parent=0 // pred_check_branch
    %19 = sbr.rel (0) target = $region9
  $region8: #{tpu_custom_call.1} parent=0 // pred_region
    _
  $region9: #{tpu_custom_call.1} parent=0 // pred_fallthru
    _
  // Predicated region
  $region10: #{tpu_custom_call.1} parent=0 // pred_check
    _
  $region11: #{tpu_custom_call.1} parent=0 // pred_check_branch
    %21 = sbr.rel (0) target = $region13
  $region12: #{tpu_custom_call.1} parent=0 // pred_region
    _
  $region13: #{tpu_custom_call.1} parent=0 // pred_fallthru
    _
  // Predicated region
  $region14: #{tpu_custom_call.1} parent=0 // pred_check
    _
  $region15: #{tpu_custom_call.1} parent=0 // pred_check_branch
    %23 = sbr.rel (0) target = $region17
  $region16: #{tpu_custom_call.1} parent=0 // pred_region
    _
  $region17: #{tpu_custom_call.1} parent=0 // pred_fallthru
    _
  // Predicated region
  $region18: #{tpu_custom_call.1} parent=0 // pred_check
    _
  $region19: #{tpu_custom_call.1} parent=0 // pred_check_branch
    %25 = sbr.rel (0) target = $region21
  $region20: #{tpu_custom_call.1} parent=0 // pred_region
    _
  $region21: #{tpu_custom_call.1} parent=0 // pred_fallthru
    _
  // Predicated region
  $region22: #{tpu_custom_call.1} parent=0 // pred_check
    _
  $region23: #{tpu_custom_call.1} parent=0 // pred_check_branch
    %27 = sbr.rel (0) target = $region25
  $region24: #{tpu_custom_call.1} parent=0 // pred_region
    _
  $region25: #{tpu_custom_call.1} parent=0 // pred_fallthru
    _
  // Predicated region
  $region26: #{tpu_custom_call.1} parent=0 // pred_check
    _
  $region27: #{tpu_custom_call.1} parent=0 // pred_check_branch
    %29 = sbr.rel (0) target = $region29
  $region28: #{tpu_custom_call.1} parent=0 // pred_region
    _
  $region29: #{tpu_custom_call.1} parent=0 // pred_fallthru
    _
  // Predicated region
  $region30: #{tpu_custom_call.1} parent=0 // pred_check
    _
  $region31: #{tpu_custom_call.1} parent=0 // pred_check_branch
    %31 = sbr.rel (0) target = $region33
  $region32: #{tpu_custom_call.1} parent=0 // pred_region
    _
  $region33: #{tpu_custom_call.1} parent=0 // pred_fallthru
    _
  // Predicated region
  $region34: #{tpu_custom_call.1} parent=0 // pred_check
    _
  $region35: #{tpu_custom_call.1} parent=0 // pred_check_branch
    %33 = sbr.rel (0) target = $region37
  $region36: #{tpu_custom_call.1} parent=0 // pred_region
    _
  $region37: #{tpu_custom_call.1} parent=0 // pred_fallthru
    _
  // Predicated region
  $region38: #{tpu_custom_call.1} parent=0 // pred_check
    _
  $region39: #{tpu_custom_call.1} parent=0 // pred_check_branch
    %35 = sbr.rel (0) target = $region41
  $region40: #{tpu_custom_call.1} parent=0 // pred_region
    _
  $region41: #{tpu_custom_call.1} parent=0 // pred_fallthru
    _
  // Predicated region
  $region42: #{tpu_custom_call.1} parent=0 // pred_check
    _
  $region43: #{tpu_custom_call.1} parent=0 // pred_check_branch
    %37 = sbr.rel (0) target = $region45
  $region44: #{tpu_custom_call.1} parent=0 // pred_region
    _
  $region45: #{tpu_custom_call.1} parent=0 // pred_fallthru
    _
  %v38 = vld [vmem:[%s0] sm:$0xff]
  %v39 = vld [vmem:[%s1] sm:$0xff]
  %v40 = vld [vmem:[%s1 + $0x8] sm:$0xff]
  %v41 = vld [vmem:[%s1 + $0x10] sm:$0xff]
  %v42 = vld [vmem:[%s1 + $0x18] sm:$0xff]
  %v43 = vld [vmem:[%s2] sm:$0x1]
  %v45 = vlaneseq
  %v46 = vshrl.u32 %v45, 7
  %v47 = vsub.s32 0, %v46
  %v48 = vrot.slane %v43, %v47
  %vm50 = vcmask 261120
  %v52 = vsel %vm50, %v38, 0
  %54 = vmatprep.subr.mxu0 0.0
  %55 = vmatpush1.msra.mxu0 0.0
  %56 = vmatprep.subr.mxu0 0.0
  %57 = vmatpush1.msra.mxu0 0.0
  %58 = vmatprep.subr.mxu0 0.0
  %59 = vmatpush1.msra.mxu0 0.0
  %60 = vmatprep.subr.mxu0 0.0
  %61 = vmatpush1.msra.mxu0 0.0
  %62 = vmatprep.subr.mxu0 0.0
  %63 = vmatpush1.msra.mxu0 0.0
  %64 = vmatprep.subr.mxu0 0.0
  %65 = vmatpush1.msra.mxu0 0.0
  %66 = vmatprep.subr.mxu0 0.0
  %67 = vmatpush1.msra.mxu0 0.0
  %68 = vmatprep.subr.mxu0 0.0
  %69 = vmatpush1.msra.mxu0 0.0
  %70 = vmatprep.subr.mxu0 0.0
  %71 = vmatpush1.msra.mxu0 0.0
  %72 = vmatprep.subr.mxu0 0.0
  %73 = vmatpush1.msra.mxu0 0.0
  %74 = vmatprep.subr.mxu0 0.0
  %75 = vmatpush1.msra.mxu0 0.0
  %76 = vmatprep.subr.mxu0 0.0
  %77 = vmatpush1.msra.mxu0 0.0
  %78 = vmatprep.subr.mxu0 0.0
  %79 = vmatpush1.msra.mxu0 %v42
  %80 = vmatprep.subr.mxu0 0.0
  %81 = vmatpush1.msra.mxu0 %v41
  %82 = vmatprep.subr.mxu0 0.0
  %83 = vmatpush1.msra.mxu0 %v40
  %84 = vmatprep.subr.mxu0 0.0
  %85 = vmatpush1.msra.mxu0 %v39
  %86 = vmatprep.subr.mxu0 0.0
  %87 = vmatpush2.msra.mxu0 0.0
  %88 = vmatprep.subr.mxu0 0.0
  %89 = vmatpush2.msra.mxu0 0.0
  %90 = vmatprep.subr.mxu0 0.0
  %91 = vmatpush2.msra.mxu0 0.0
  %92 = vmatprep.subr.mxu0 0.0
  %93 = vmatpush2.msra.mxu0 0.0
  %94 = vmatprep.subr.mxu0 0.0
  %95 = vmatpush2.msra.mxu0 0.0
  %96 = vmatprep.subr.mxu0 0.0
  %97 = vmatpush2.msra.mxu0 0.0
  %98 = vmatprep.subr.mxu0 0.0
  %99 = vmatpush2.msra.mxu0 0.0
  %100 = vmatprep.subr.mxu0 0.0
  %101 = vmatpush2.msra.mxu0 0.0
  %102 = vmatprep.subr.mxu0 0.0
  %103 = vmatpush2.msra.mxu0 0.0
  %104 = vmatprep.subr.mxu0 0.0
  %105 = vmatpush2.msra.mxu0 0.0
  %106 = vmatprep.subr.mxu0 0.0
  %107 = vmatpush2.msra.mxu0 0.0
  %108 = vmatprep.subr.mxu0 0.0
  %109 = vmatpush2.msra.mxu0 0.0
  %110 = vmatprep.subr.mxu0 0.0
  %111 = vmatpush2.msra.mxu0 0.0
  %112 = vmatprep.subr.mxu0 0.0
  %113 = vmatpush2.msra.mxu0 0.0
  %114 = vmatprep.subr.mxu0 0.0
  %115 = vmatpush2.msra.mxu0 0.0
  %116 = vmatprep.subr.mxu0 0.0
  %117 = vmatpush2.msra.mxu0 0.0
  %118 = vmatprep.mubr.f32.mxu0 0.0
  %119 = vmatmul.mubr.f32.gmra.mxu0 %v52
  %v120 = vpop.f32.mrf.mxu0
  %v121 = vadd.f32 %v48, %v120
  %v122 = vpop.f32.mrf.mxu0
  %123 = vdwg.mxu0
  %v124 = vmax.f32 %v121, 0.0
  %v125 = vld [vmem:[%s3] sm:$0xff]
  %v126 = vld [vmem:[%s3 + $0x8] sm:$0xff]
  %v127 = vld [vmem:[%s3 + $0x10] sm:$0xff]
  %v128 = vld [vmem:[%s3 + $0x18] sm:$0xff]
  %v129 = vld [vmem:[%s3 + $0x20] sm:$0xff]
  %v130 = vld [vmem:[%s3 + $0x28] sm:$0xff]
  %v131 = vld [vmem:[%s3 + $0x30] sm:$0xff]
  %v132 = vld [vmem:[%s3 + $0x38] sm:$0xff]
  %v133 = vld [vmem:[%s3 + $0x40] sm:$0xff]
  %v134 = vld [vmem:[%s3 + $0x48] sm:$0xff]
  %v135 = vld [vmem:[%s3 + $0x50] sm:$0xff]
  %v136 = vld [vmem:[%s3 + $0x58] sm:$0xff]
  %v137 = vld [vmem:[%s3 + $0x60] sm:$0xff]
  %v138 = vld [vmem:[%s3 + $0x68] sm:$0xff]
  %v139 = vld [vmem:[%s3 + $0x70] sm:$0xff]
  %v140 = vld [vmem:[%s3 + $0x78] sm:$0xff]
  %v141 = vld [vmem:[%s4] sm:$0x1]
  %v143 = vlaneseq
  %v144 = vshrl.u32 %v143, 7
  %v145 = vsub.s32 0, %v144
  %v146 = vrot.slane %v141, %v145
  %148 = vmatprep.subr.mxu0 0.0
  %149 = vmatpush1.msra.mxu0 %v140
  %150 = vmatprep.subr.mxu0 0.0
  %151 = vmatpush1.msra.mxu0 %v139
  %152 = vmatprep.subr.mxu0 0.0
  %153 = vmatpush1.msra.mxu0 %v138
  %154 = vmatprep.subr.mxu0 0.0
  %155 = vmatpush1.msra.mxu0 %v137
  %156 = vmatprep.subr.mxu0 0.0
  %157 = vmatpush1.msra.mxu0 %v136
  %158 = vmatprep.subr.mxu0 0.0
  %159 = vmatpush1.msra.mxu0 %v135
  %160 = vmatprep.subr.mxu0 0.0
  %161 = vmatpush1.msra.mxu0 %v134
  %162 = vmatprep.subr.mxu0 0.0
  %163 = vmatpush1.msra.mxu0 %v133
  %164 = vmatprep.subr.mxu0 0.0
  %165 = vmatpush1.msra.mxu0 %v132
  %166 = vmatprep.subr.mxu0 0.0
  %167 = vmatpush1.msra.mxu0 %v131
  %168 = vmatprep.subr.mxu0 0.0
  %169 = vmatpush1.msra.mxu0 %v130
  %170 = vmatprep.subr.mxu0 0.0
  %171 = vmatpush1.msra.mxu0 %v129
  %172 = vmatprep.subr.mxu0 0.0
  %173 = vmatpush1.msra.mxu0 %v128
  %174 = vmatprep.subr.mxu0 0.0
  %175 = vmatpush1.msra.mxu0 %v127
  %176 = vmatprep.subr.mxu0 0.0
  %177 = vmatpush1.msra.mxu0 %v126
  %178 = vmatprep.subr.mxu0 0.0
  %179 = vmatpush1.msra.mxu0 %v125
  %180 = vmatprep.subr.mxu0 0.0
  %181 = vmatpush2.msra.mxu0 0.0
  %182 = vmatprep.subr.mxu0 0.0
  %183 = vmatpush2.msra.mxu0 0.0
  %184 = vmatprep.subr.mxu0 0.0
  %185 = vmatpush2.msra.mxu0 0.0
  %186 = vmatprep.subr.mxu0 0.0
  %187 = vmatpush2.msra.mxu0 0.0
  %188 = vmatprep.subr.mxu0 0.0
  %189 = vmatpush2.msra.mxu0 0.0
  %190 = vmatprep.subr.mxu0 0.0
  %191 = vmatpush2.msra.mxu0 0.0
  %192 = vmatprep.subr.mxu0 0.0
  %193 = vmatpush2.msra.mxu0 0.0
  %194 = vmatprep.subr.mxu0 0.0
  %195 = vmatpush2.msra.mxu0 0.0
  %196 = vmatprep.subr.mxu0 0.0
  %197 = vmatpush2.msra.mxu0 0.0
  %198 = vmatprep.subr.mxu0 0.0
  %199 = vmatpush2.msra.mxu0 0.0
  %200 = vmatprep.subr.mxu0 0.0
  %201 = vmatpush2.msra.mxu0 0.0
  %202 = vmatprep.subr.mxu0 0.0
  %203 = vmatpush2.msra.mxu0 0.0
  %204 = vmatprep.subr.mxu0 0.0
  %205 = vmatpush2.msra.mxu0 0.0
  %206 = vmatprep.subr.mxu0 0.0
  %207 = vmatpush2.msra.mxu0 0.0
  %208 = vmatprep.subr.mxu0 0.0
  %209 = vmatpush2.msra.mxu0 0.0
  %210 = vmatprep.subr.mxu0 0.0
  %211 = vmatpush2.msra.mxu0 0.0
  %212 = vmatprep.mubr.f32.mxu0 0.0
  %213 = vmatmul.mubr.f32.gmra.mxu0 %v124
  %v214 = vpop.f32.mrf.mxu0
  %v215 = vadd.f32 %v146, %v214
  %v216 = vpop.f32.mrf.mxu0
  %217 = vdwg.mxu0
  %v218 = vmax.f32 %v215, 0.0
  %v219 = vld [vmem:[%s5] sm:$0xff]
  %v220 = vld [vmem:[%s5 + $0x8] sm:$0xff]
  %v221 = vld [vmem:[%s5 + $0x10] sm:$0xff]
  %v222 = vld [vmem:[%s5 + $0x18] sm:$0xff]
  %v223 = vld [vmem:[%s5 + $0x20] sm:$0xff]
  %v224 = vld [vmem:[%s5 + $0x28] sm:$0xff]
  %v225 = vld [vmem:[%s5 + $0x30] sm:$0xff]
  %v226 = vld [vmem:[%s5 + $0x38] sm:$0xff]
  %v227 = vld [vmem:[%s5 + $0x40] sm:$0xff]
  %v228 = vld [vmem:[%s5 + $0x48] sm:$0xff]
  %v229 = vld [vmem:[%s5 + $0x50] sm:$0xff]
  %v230 = vld [vmem:[%s5 + $0x58] sm:$0xff]
  %v231 = vld [vmem:[%s5 + $0x60] sm:$0xff]
  %v232 = vld [vmem:[%s5 + $0x68] sm:$0xff]
  %v233 = vld [vmem:[%s5 + $0x70] sm:$0xff]
  %v234 = vld [vmem:[%s5 + $0x78] sm:$0xff]
  %v235 = vld [vmem:[%s6] sm:$0x3]
  %v237 = vlaneseq
  %v238 = vshrl.u32 %v237, 7
  %v239 = vsub.s32 0, %v238
  %v240 = vrot.slane %v235, %v239
  %v241 = vlaneseq
  %v242 = vshrl.u32 %v241, 7
  %v243 = vsub.s32 1, %v242
  %v244 = vrot.slane %v235, %v243
  %vm247 = vcmask 523264
  %v249 = vsel %vm247, %v218, 0
  %251 = vmatprep.subr.mxu0 0.0
  %252 = vmatpush1.msra.mxu0 0.0
  %253 = vmatprep.subr.mxu0 0.0
  %254 = vmatpush1.msra.mxu0 0.0
  %255 = vmatprep.subr.mxu0 0.0
  %256 = vmatpush1.msra.mxu0 0.0
  %257 = vmatprep.subr.mxu0 0.0
  %258 = vmatpush1.msra.mxu0 0.0
  %259 = vmatprep.subr.mxu0 0.0
  %260 = vmatpush1.msra.mxu0 0.0
  %261 = vmatprep.subr.mxu0 0.0
  %262 = vmatpush1.msra.mxu0 0.0
  %263 = vmatprep.subr.mxu0 0.0
  %264 = vmatpush1.msra.mxu0 0.0
  %265 = vmatprep.subr.mxu0 0.0
  %266 = vmatpush1.msra.mxu0 0.0
  %267 = vmatprep.subr.mxu0 %v234
  %268 = vmatpush1.msra.mxu0 %v233
  %269 = vmatprep.subr.mxu0 %v232
  %270 = vmatpush1.msra.mxu0 %v231
  %271 = vmatprep.subr.mxu0 %v230
  %272 = vmatpush1.msra.mxu0 %v229
  %273 = vmatprep.subr.mxu0 %v228
  %274 = vmatpush1.msra.mxu0 %v227
  %275 = vmatprep.subr.mxu0 %v226
  %276 = vmatpush1.msra.mxu0 %v225
  %277 = vmatprep.subr.mxu0 %v224
  %278 = vmatpush1.msra.mxu0 %v223
  %279 = vmatprep.subr.mxu0 %v222
  %280 = vmatpush1.msra.mxu0 %v221
  %281 = vmatprep.subr.mxu0 %v220
  %282 = vmatpush1.msra.mxu0 %v219
  %283 = vmatprep.subr.mxu0 0.0
  %284 = vmatpush2.msra.mxu0 0.0
  %285 = vmatprep.subr.mxu0 0.0
  %286 = vmatpush2.msra.mxu0 0.0
  %287 = vmatprep.subr.mxu0 0.0
  %288 = vmatpush2.msra.mxu0 0.0
  %289 = vmatprep.subr.mxu0 0.0
  %290 = vmatpush2.msra.mxu0 0.0
  %291 = vmatprep.subr.mxu0 0.0
  %292 = vmatpush2.msra.mxu0 0.0
  %293 = vmatprep.subr.mxu0 0.0
  %294 = vmatpush2.msra.mxu0 0.0
  %295 = vmatprep.subr.mxu0 0.0
  %296 = vmatpush2.msra.mxu0 0.0
  %297 = vmatprep.subr.mxu0 0.0
  %298 = vmatpush2.msra.mxu0 0.0
  %299 = vmatprep.subr.mxu0 0.0
  %300 = vmatpush2.msra.mxu0 0.0
  %301 = vmatprep.subr.mxu0 0.0
  %302 = vmatpush2.msra.mxu0 0.0
  %303 = vmatprep.subr.mxu0 0.0
  %304 = vmatpush2.msra.mxu0 0.0
  %305 = vmatprep.subr.mxu0 0.0
  %306 = vmatpush2.msra.mxu0 0.0
  %307 = vmatprep.subr.mxu0 0.0
  %308 = vmatpush2.msra.mxu0 0.0
  %309 = vmatprep.subr.mxu0 0.0
  %310 = vmatpush2.msra.mxu0 0.0
  %311 = vmatprep.subr.mxu0 0.0
  %312 = vmatpush2.msra.mxu0 0.0
  %313 = vmatprep.subr.mxu0 0.0
  %314 = vmatpush2.msra.mxu0 0.0
  %315 = vmatprep.mubr.f32.mxu0 0.0
  %316 = vmatmul.mubr.f32.gmra.mxu0 %v249
  %v317 = vpop.f32.mrf.mxu0
  %v318 = vadd.f32 %v240, %v317
  %v319 = vpop.f32.mrf.mxu0
  %v320 = vadd.f32 %v244, %v319
  %321 = vdwg.mxu0
  %323 = vrot.lane.b32.xlu0 %v318, 64
  %v324 = vpop.permute.xlu0 %323
  %v325 = vsel %vm247, %v318, 0
  %v327 = vsel %vm247, %v324, 0
  %329 = vmatprep.subr.mxu0 0.0
  %330 = vmatpush1.xpose.msra.mxu0 0.0
  %331 = vmatprep.subr.mxu0 0.0
  %332 = vmatpush1.xpose.msra.mxu0 0.0
  %333 = vmatprep.subr.mxu0 0.0
  %334 = vmatpush1.xpose.msra.mxu0 0.0
  %335 = vmatprep.subr.mxu0 0.0
  %336 = vmatpush1.xpose.msra.mxu0 0.0
  %337 = vmatprep.subr.mxu0 0.0
  %338 = vmatpush1.xpose.msra.mxu0 0.0
  %339 = vmatprep.subr.mxu0 0.0
  %340 = vmatpush1.xpose.msra.mxu0 0.0
  %341 = vmatprep.subr.mxu0 0.0
  %342 = vmatpush1.xpose.msra.mxu0 0.0
  %343 = vmatprep.subr.mxu0 0.0
  %344 = vmatpush1.xpose.msra.mxu0 0.0
  %345 = vmatprep.subr.mxu0 0.0
  %346 = vmatpush1.xpose.msra.mxu0 0.0
  %347 = vmatprep.subr.mxu0 0.0
  %348 = vmatpush1.xpose.msra.mxu0 0.0
  %349 = vmatprep.subr.mxu0 0.0
  %350 = vmatpush1.xpose.msra.mxu0 0.0
  %351 = vmatprep.subr.mxu0 0.0
  %352 = vmatpush1.xpose.msra.mxu0 0.0
  %353 = vmatprep.subr.mxu0 0.0
  %354 = vmatpush1.xpose.msra.mxu0 0.0
  %355 = vmatprep.subr.mxu0 0.0
  %356 = vmatpush1.xpose.msra.mxu0 0.0
  %357 = vmatprep.subr.mxu0 0.0
  %358 = vmatpush1.xpose.msra.mxu0 0.0
  %359 = vmatprep.subr.mxu0 0.0
  %360 = vmatpush1.xpose.msra.mxu0 %v327
  %361 = vmatprep.subr.mxu0 0.0
  %362 = vmatpush2.xpose.msra.mxu0 0.0
  %363 = vmatprep.subr.mxu0 0.0
  %364 = vmatpush2.xpose.msra.mxu0 0.0
  %365 = vmatprep.subr.mxu0 0.0
  %366 = vmatpush2.xpose.msra.mxu0 0.0
  %367 = vmatprep.subr.mxu0 0.0
  %368 = vmatpush2.xpose.msra.mxu0 0.0
  %369 = vmatprep.subr.mxu0 0.0
  %370 = vmatpush2.xpose.msra.mxu0 0.0
  %371 = vmatprep.subr.mxu0 0.0
  %372 = vmatpush2.xpose.msra.mxu0 0.0
  %373 = vmatprep.subr.mxu0 0.0
  %374 = vmatpush2.xpose.msra.mxu0 0.0
  %375 = vmatprep.subr.mxu0 0.0
  %376 = vmatpush2.xpose.msra.mxu0 0.0
  %377 = vmatprep.subr.mxu0 0.0
  %378 = vmatpush2.xpose.msra.mxu0 0.0
  %379 = vmatprep.subr.mxu0 0.0
  %380 = vmatpush2.xpose.msra.mxu0 0.0
  %381 = vmatprep.subr.mxu0 0.0
  %382 = vmatpush2.xpose.msra.mxu0 0.0
  %383 = vmatprep.subr.mxu0 0.0
  %384 = vmatpush2.xpose.msra.mxu0 0.0
  %385 = vmatprep.subr.mxu0 0.0
  %386 = vmatpush2.xpose.msra.mxu0 0.0
  %387 = vmatprep.subr.mxu0 0.0
  %388 = vmatpush2.xpose.msra.mxu0 0.0
  %389 = vmatprep.subr.mxu0 0.0
  %390 = vmatpush2.xpose.msra.mxu0 0.0
  %391 = vmatprep.subr.mxu0 0.0
  %392 = vmatpush2.xpose.msra.mxu0 0.0
  %393 = vmatprep.mubr.f32.mxu0 0.0
  %394 = vmatmul.mubr.f32.gmra.mxu0 %v325
  %v395 = vpop.f32.mrf.mxu0
  %v396 = vadd.f32 0.0, %v395
  %v397 = vpop.f32.mrf.mxu0
  %398 = vdwg.mxu0
  %v399 = vmul.f32 %v396, 0.125
  %vm400 = vcmask 64512
  %v401 = vsel %vm400, %v399, -inf
  %402 = vmax.xlane.f32.xlu0 %v401
  %v403 = vpop.xlane.xlu0 %402
  %v404 = vsub.f32 %v399, %v403
  %v405 = vmul.f32 %v404, 1.442695
  %v406 = vpow.pop %v405
  %v407 = vsel %vm400, %v406, 0.0
  %408 = vadd.xlane.f32.xlu0 %v407
  %v409 = vpop.xlane.xlu0 %408
  %v410 = vrcp.pop %v409
  %v411 = vmul.f32 %v409, %v410
  %v412 = vsub.f32 2.0, %v411
  %v413 = vmul.f32 %v410, %v412
  %v414 = vmul.f32 %v406, %v413
  %v416 = vsel %vm400, %v414, 0
  %418 = vmatprep.subr.mxu0 0.0
  %419 = vmatpush1.msra.mxu0 0.0
  %420 = vmatprep.subr.mxu0 0.0
  %421 = vmatpush1.msra.mxu0 0.0
  %422 = vmatprep.subr.mxu0 0.0
  %423 = vmatpush1.msra.mxu0 0.0
  %424 = vmatprep.subr.mxu0 0.0
  %425 = vmatpush1.msra.mxu0 0.0
  %426 = vmatprep.subr.mxu0 0.0
  %427 = vmatpush1.msra.mxu0 0.0
  %428 = vmatprep.subr.mxu0 0.0
  %429 = vmatpush1.msra.mxu0 0.0
  %430 = vmatprep.subr.mxu0 0.0
  %431 = vmatpush1.msra.mxu0 0.0
  %432 = vmatprep.subr.mxu0 0.0
  %433 = vmatpush1.msra.mxu0 0.0
  %434 = vmatprep.subr.mxu0 0.0
  %435 = vmatpush1.msra.mxu0 0.0
  %436 = vmatprep.subr.mxu0 0.0
  %437 = vmatpush1.msra.mxu0 0.0
  %438 = vmatprep.subr.mxu0 0.0
  %439 = vmatpush1.msra.mxu0 0.0
  %440 = vmatprep.subr.mxu0 0.0
  %441 = vmatpush1.msra.mxu0 0.0
  %442 = vmatprep.subr.mxu0 0.0
  %443 = vmatpush1.msra.mxu0 0.0
  %444 = vmatprep.subr.mxu0 0.0
  %445 = vmatpush1.msra.mxu0 0.0
  %446 = vmatprep.subr.mxu0 0.0
  %447 = vmatpush1.msra.mxu0 0.0
  %448 = vmatprep.subr.mxu0 0.0
  %449 = vmatpush1.msra.mxu0 %v320
  %450 = vmatprep.subr.mxu0 0.0
  %451 = vmatpush2.msra.mxu0 0.0
  %452 = vmatprep.subr.mxu0 0.0
  %453 = vmatpush2.msra.mxu0 0.0
  %454 = vmatprep.subr.mxu0 0.0
  %455 = vmatpush2.msra.mxu0 0.0
  %456 = vmatprep.subr.mxu0 0.0
  %457 = vmatpush2.msra.mxu0 0.0
  %458 = vmatprep.subr.mxu0 0.0
  %459 = vmatpush2.msra.mxu0 0.0
  %460 = vmatprep.subr.mxu0 0.0
  %461 = vmatpush2.msra.mxu0 0.0
  %462 = vmatprep.subr.mxu0 0.0
  %463 = vmatpush2.msra.mxu0 0.0
  %464 = vmatprep.subr.mxu0 0.0
  %465 = vmatpush2.msra.mxu0 0.0
  %466 = vmatprep.subr.mxu0 0.0
  %467 = vmatpush2.msra.mxu0 0.0
  %468 = vmatprep.subr.mxu0 0.0
  %469 = vmatpush2.msra.mxu0 0.0
  %470 = vmatprep.subr.mxu0 0.0
  %471 = vmatpush2.msra.mxu0 0.0
  %472 = vmatprep.subr.mxu0 0.0
  %473 = vmatpush2.msra.mxu0 0.0
  %474 = vmatprep.subr.mxu0 0.0
  %475 = vmatpush2.msra.mxu0 0.0
  %476 = vmatprep.subr.mxu0 0.0
  %477 = vmatpush2.msra.mxu0 0.0
  %478 = vmatprep.subr.mxu0 0.0
  %479 = vmatpush2.msra.mxu0 0.0
  %480 = vmatprep.subr.mxu0 0.0
  %481 = vmatpush2.msra.mxu0 0.0
  %482 = vmatprep.mubr.f32.mxu0 0.0
  %483 = vmatmul.mubr.f32.gmra.mxu0 %v416
  %v484 = vpop.f32.mrf.mxu0
  %v485 = vadd.f32 %v218, %v484
  %v486 = vpop.f32.mrf.mxu0
  %487 = vdwg.mxu0
  %v488 = vld [vmem:[%s7] sm:$0xff]
  %v489 = vld [vmem:[%s7 + $0x8] sm:$0xff]
  %v490 = vld [vmem:[%s7 + $0x10] sm:$0xff]
  %v491 = vld [vmem:[%s7 + $0x18] sm:$0xff]
  %v492 = vld [vmem:[%s7 + $0x20] sm:$0xff]
  %v493 = vld [vmem:[%s7 + $0x28] sm:$0xff]
  %v494 = vld [vmem:[%s7 + $0x30] sm:$0xff]
  %v495 = vld [vmem:[%s7 + $0x38] sm:$0xff]
  %v496 = vld [vmem:[%s8] sm:$0x1]
  %v498 = vlaneseq
  %v499 = vshrl.u32 %v498, 7
  %v500 = vsub.s32 0, %v499
  %v501 = vrot.slane %v496, %v500
  %v504 = vsel %vm247, %v485, 0
  %506 = vmatprep.subr.mxu0 0.0
  %507 = vmatpush1.msra.mxu0 0.0
  %508 = vmatprep.subr.mxu0 0.0
  %509 = vmatpush1.msra.mxu0 0.0
  %510 = vmatprep.subr.mxu0 0.0
  %511 = vmatpush1.msra.mxu0 0.0
  %512 = vmatprep.subr.mxu0 0.0
  %513 = vmatpush1.msra.mxu0 0.0
  %514 = vmatprep.subr.mxu0 0.0
  %515 = vmatpush1.msra.mxu0 0.0
  %516 = vmatprep.subr.mxu0 0.0
  %517 = vmatpush1.msra.mxu0 0.0
  %518 = vmatprep.subr.mxu0 0.0
  %519 = vmatpush1.msra.mxu0 0.0
  %520 = vmatprep.subr.mxu0 0.0
  %521 = vmatpush1.msra.mxu0 0.0
  %522 = vmatprep.subr.mxu0 0.0
  %523 = vmatpush1.msra.mxu0 %v495
  %524 = vmatprep.subr.mxu0 0.0
  %525 = vmatpush1.msra.mxu0 %v494
  %526 = vmatprep.subr.mxu0 0.0
  %527 = vmatpush1.msra.mxu0 %v493
  %528 = vmatprep.subr.mxu0 0.0
  %529 = vmatpush1.msra.mxu0 %v492
  %530 = vmatprep.subr.mxu0 0.0
  %531 = vmatpush1.msra.mxu0 %v491
  %532 = vmatprep.subr.mxu0 0.0
  %533 = vmatpush1.msra.mxu0 %v490
  %534 = vmatprep.subr.mxu0 0.0
  %535 = vmatpush1.msra.mxu0 %v489
  %536 = vmatprep.subr.mxu0 0.0
  %537 = vmatpush1.msra.mxu0 %v488
  %538 = vmatprep.subr.mxu0 0.0
  %539 = vmatpush2.msra.mxu0 0.0
  %540 = vmatprep.subr.mxu0 0.0
  %541 = vmatpush2.msra.mxu0 0.0
  %542 = vmatprep.subr.mxu0 0.0
  %543 = vmatpush2.msra.mxu0 0.0
  %544 = vmatprep.subr.mxu0 0.0
  %545 = vmatpush2.msra.mxu0 0.0
  %546 = vmatprep.subr.mxu0 0.0
  %547 = vmatpush2.msra.mxu0 0.0
  %548 = vmatprep.subr.mxu0 0.0
  %549 = vmatpush2.msra.mxu0 0.0
  %550 = vmatprep.subr.mxu0 0.0
  %551 = vmatpush2.msra.mxu0 0.0
  %552 = vmatprep.subr.mxu0 0.0
  %553 = vmatpush2.msra.mxu0 0.0
  %554 = vmatprep.subr.mxu0 0.0
  %555 = vmatpush2.msra.mxu0 0.0
  %556 = vmatprep.subr.mxu0 0.0
  %557 = vmatpush2.msra.mxu0 0.0
  %558 = vmatprep.subr.mxu0 0.0
  %559 = vmatpush2.msra.mxu0 0.0
  %560 = vmatprep.subr.mxu0 0.0
  %561 = vmatpush2.msra.mxu0 0.0
  %562 = vmatprep.subr.mxu0 0.0
  %563 = vmatpush2.msra.mxu0 0.0
  %564 = vmatprep.subr.mxu0 0.0
  %565 = vmatpush2.msra.mxu0 0.0
  %566 = vmatprep.subr.mxu0 0.0
  %567 = vmatpush2.msra.mxu0 0.0
  %568 = vmatprep.subr.mxu0 0.0
  %569 = vmatpush2.msra.mxu0 0.0
  %570 = vmatprep.mubr.f32.mxu0 0.0
  %571 = vmatmul.mubr.f32.gmra.mxu0 %v504
  %v572 = vpop.f32.mrf.mxu0
  %v573 = vadd.f32 %v501, %v572
  %v574 = vpop.f32.mrf.mxu0
  %575 = vdwg.mxu0
  %v576 = vmax.f32 %v573, 0.0
  %v577 = vld [vmem:[%s9] sm:$0xff]
  %v578 = vld [vmem:[%s9 + $0x8] sm:$0xff]
  %v579 = vld [vmem:[%s9 + $0x10] sm:$0xff]
  %v580 = vld [vmem:[%s9 + $0x18] sm:$0xff]
  %v581 = vld [vmem:[%s10] sm:$0x1]
  %v583 = vlaneseq
  %v584 = vshrl.u32 %v583, 7
  %v585 = vsub.s32 0, %v584
  %v586 = vrot.slane %v581, %v585
  %v589 = vsel %vm50, %v576, 0
  %591 = vmatprep.subr.mxu0 0.0
  %592 = vmatpush1.msra.mxu0 0.0
  %593 = vmatprep.subr.mxu0 0.0
  %594 = vmatpush1.msra.mxu0 0.0
  %595 = vmatprep.subr.mxu0 0.0
  %596 = vmatpush1.msra.mxu0 0.0
  %597 = vmatprep.subr.mxu0 0.0
  %598 = vmatpush1.msra.mxu0 0.0
  %599 = vmatprep.subr.mxu0 0.0
  %600 = vmatpush1.msra.mxu0 0.0
  %601 = vmatprep.subr.mxu0 0.0
  %602 = vmatpush1.msra.mxu0 0.0
  %603 = vmatprep.subr.mxu0 0.0
  %604 = vmatpush1.msra.mxu0 0.0
  %605 = vmatprep.subr.mxu0 0.0
  %606 = vmatpush1.msra.mxu0 0.0
  %607 = vmatprep.subr.mxu0 0.0
  %608 = vmatpush1.msra.mxu0 0.0
  %609 = vmatprep.subr.mxu0 0.0
  %610 = vmatpush1.msra.mxu0 0.0
  %611 = vmatprep.subr.mxu0 0.0
  %612 = vmatpush1.msra.mxu0 0.0
  %613 = vmatprep.subr.mxu0 0.0
  %614 = vmatpush1.msra.mxu0 0.0
  %615 = vmatprep.subr.mxu0 0.0
  %616 = vmatpush1.msra.mxu0 %v580
  %617 = vmatprep.subr.mxu0 0.0
  %618 = vmatpush1.msra.mxu0 %v579
  %619 = vmatprep.subr.mxu0 0.0
  %620 = vmatpush1.msra.mxu0 %v578
  %621 = vmatprep.subr.mxu0 0.0
  %622 = vmatpush1.msra.mxu0 %v577
  %623 = vmatprep.subr.mxu0 0.0
  %624 = vmatpush2.msra.mxu0 0.0
  %625 = vmatprep.subr.mxu0 0.0
  %626 = vmatpush2.msra.mxu0 0.0
  %627 = vmatprep.subr.mxu0 0.0
  %628 = vmatpush2.msra.mxu0 0.0
  %629 = vmatprep.subr.mxu0 0.0
  %630 = vmatpush2.msra.mxu0 0.0
  %631 = vmatprep.subr.mxu0 0.0
  %632 = vmatpush2.msra.mxu0 0.0
  %633 = vmatprep.subr.mxu0 0.0
  %634 = vmatpush2.msra.mxu0 0.0
  %635 = vmatprep.subr.mxu0 0.0
  %636 = vmatpush2.msra.mxu0 0.0
  %637 = vmatprep.subr.mxu0 0.0
  %638 = vmatpush2.msra.mxu0 0.0
  %639 = vmatprep.subr.mxu0 0.0
  %640 = vmatpush2.msra.mxu0 0.0
  %641 = vmatprep.subr.mxu0 0.0
  %642 = vmatpush2.msra.mxu0 0.0
  %643 = vmatprep.subr.mxu0 0.0
  %644 = vmatpush2.msra.mxu0 0.0
  %645 = vmatprep.subr.mxu0 0.0
  %646 = vmatpush2.msra.mxu0 0.0
  %647 = vmatprep.subr.mxu0 0.0
  %648 = vmatpush2.msra.mxu0 0.0
  %649 = vmatprep.subr.mxu0 0.0
  %650 = vmatpush2.msra.mxu0 0.0
  %651 = vmatprep.subr.mxu0 0.0
  %652 = vmatpush2.msra.mxu0 0.0
  %653 = vmatprep.subr.mxu0 0.0
  %654 = vmatpush2.msra.mxu0 0.0
  %655 = vmatprep.mubr.f32.mxu0 0.0
  %656 = vmatmul.mubr.f32.gmra.mxu0 %v589
  %v657 = vpop.f32.mrf.mxu0
  %v658 = vadd.f32 %v586, %v657
  %v659 = vpop.f32.mrf.mxu0
  %660 = vdwg.mxu0
  %vm661 = vcmask 15360
  %662 = vst.msk [vmem:[%s11] sm:$0xff] %vm661, %v658
  // Predicated region
  $region46: #{tpu_custom_call.1} parent=0 // pred_check
    _
  $region47: #{tpu_custom_call.1} parent=0 // pred_check_branch
    %664 = sbr.rel (0) target = $region49
  $region48: #{tpu_custom_call.1} parent=0 // pred_region
    _
  $region49: #{tpu_custom_call.1} parent=0 // pred_fallthru
    _
  // Predicated region
  $region50: #{tpu_custom_call.1} parent=0 // pred_check
    _
  $region51: #{tpu_custom_call.1} parent=0 // pred_check_branch
    %666 = sbr.rel (0) target = $region53
  $region52: #{tpu_custom_call.1} parent=0 // pred_region
    _
  $region53: #{tpu_custom_call.1} parent=0 // pred_fallthru
    _

</llo_original>
